<compile_context>
chip_gen: v7x
topology: tpu7x:2x2x1
jax: 0.10.0
libtpu: 0.0.40
codegen_flags: <defaults>
</compile_context>

<pallas_src>
import functools
import numpy as np
import jax
import jax.numpy as jnp
from jax.experimental import pallas as pl
from jax.experimental.pallas import tpu as pltpu

LANE = 128


def build_legendre_coefs(n: int):
    """Replicates LegendreBasis.__init__ coefficient recurrence exactly (python floats).

    Used only by the pure-JAX reference for verification."""
    assert n > 0
    coefs_list = [None] * n
    coefs_list[0] = [1]
    if n > 1:
        coefs_list[1] = [0, 1]
    if n > 2:
        for i in range(2, n):
            c0 = coefs_list[i - 2]
            c1 = coefs_list[i - 1]
            coefs = [0] * (i + 1)
            coefs[0] = -(i - 1) / i * c0[0]
            for j in range(1, i - 1):
                coefs[j] = (2 * i - 1) / i * c1[j - 1] - (i - 1) / i * c0[j]
            coefs[i - 1] = (2 * i - 1) / i * c1[i - 2]
            coefs[i] = (2 * i - 1) / i * c1[i - 1]
            coefs_list[i] = coefs
    return coefs_list


def _legendre_kernel(params_ref, x_ref, o_ref, *, n):
    # params_ref: SMEM (2,)            -> [w, b] of the nn.Linear(1, 1)
    # x_ref:      VMEM (rows, 128)     -> lane-dense block of flattened inputs
    # o_ref:      VMEM (n, rows, 128)  -> plane i = P_i(w*x + b)
    w = params_ref[0]
    b = params_ref[1]
    xa = x_ref[...] * w + b                      # affine on the (implicit) size-1 feature dim

    # Three-term Legendre recurrence, streaming one output plane at a time.
    p_prev = jnp.ones_like(xa)                   # P_0
    o_ref[0] = p_prev
    if n > 1:
        p_cur = xa                               # P_1
        o_ref[1] = p_cur
        for i in range(2, n):                    # static unroll (n is small)
            a = (2.0 * i - 1.0) / float(i)
            c = (i - 1.0) / float(i)
            p_next = a * xa * p_cur - c * p_prev
            o_ref[i] = p_next
            p_prev, p_cur = p_cur, p_next


def _round_up(v, m):
    return ((v + m - 1) // m) * m


def legendre_rand_basis(x, w, b, n, *, max_block_rows=512):
    """x: (..., 1) float32. Returns (..., n) float32.

    max_block_rows=512 keeps the double-buffered in+out footprint around ~4 MiB,
    well under v7x's 64 MiB VMEM (and trivially under v5e/v6e's 128 MiB)."""
    lead_shape = x.shape[:-1]
    assert x.shape[-1] == 1
    M = int(np.prod(lead_shape)) if lead_shape else 1

    # Lane-dense layout: flatten, pad to a whole number of (block_rows, 128) tiles.
    rows_needed = max(1, -(-M // LANE))
    block_rows = min(max_block_rows, _round_up(rows_needed, 8))
    R = _round_up(rows_needed, block_rows)
    M_pad = R * LANE

    x_flat = x.reshape(M).astype(jnp.float32)
    if M_pad != M:
        x_flat = jnp.pad(x_flat, (0, M_pad - M))
    x2 = x_flat.reshape(R, LANE)

    params = jnp.array([w, b], dtype=jnp.float32)
    kernel = functools.partial(_legendre_kernel, n=n)

    # VMEM budget: double-buffered input block + output block, plus headroom.
    block_bytes = block_rows * LANE * 4 * (1 + n)
    vmem_limit = min(2 * block_bytes + (8 << 20), 32 << 20)

    out = pl.pallas_call(
        kernel,
        out_shape=jax.ShapeDtypeStruct((n, R, LANE), jnp.float32),
        grid_spec=pltpu.PrefetchScalarGridSpec(
            num_scalar_prefetch=0,
            grid=(R // block_rows,),
            in_specs=[
                pl.BlockSpec(memory_space=pltpu.MemorySpace.SMEM),      # [w, b]
                pl.BlockSpec((block_rows, LANE), lambda i: (i, 0)),     # x rows (lane-dense)
            ],
            out_specs=pl.BlockSpec((n, block_rows, LANE), lambda i: (0, i, 0)),
        ),
        compiler_params=pltpu.CompilerParams(
            dimension_semantics=("parallel",),   # v7x: shard row blocks across both TensorCores
            vmem_limit_bytes=vmem_limit,
        ),
    )(params, x2)

    # (n, R, 128) -> (R, 128, n) -> (M_pad, n) -> (..., n)
    out = jnp.transpose(out, (1, 2, 0)).reshape(M_pad, n)[:M]
    return out.reshape(*lead_shape, n)


def legendre_rand_basis_ref(x, w, b, n):
    """Pure-JAX reference mirroring the torch module (monomial power series), for verification."""
    coefs_list = build_legendre_coefs(n)
    xa = x * w + b
    cols = []
    for coefs in coefs_list:
        y = jnp.ones_like(xa)
        u = jnp.zeros_like(xa)
        for c in coefs:
            u = u + (1.0 * float(c)) * y
            y = y * xa
        cols.append(u)
    return jnp.concatenate(cols, axis=-1)


if __name__ == "__main__":
    n = 6
    # Deterministic affine (nn.Linear(1,1)) parameters — synthetic, not a checkpoint load.
    w = 0.75
    b = -0.25

    key = jax.random.PRNGKey(0)
    k1, k2 = jax.random.split(key)

    # (..., 1) inputs like the torch module expects.
    x1 = jax.random.normal(k1, (2, 8, 1), dtype=jnp.float32)
    x2 = jax.random.normal(k2, (3, 5, 7, 1), dtype=jnp.float32)

    out1 = jax.block_until_ready(legendre_rand_basis(x1, w, b, n))
    out2 = jax.block_until_ready(legendre_rand_basis(x2, w, b, n))

    ref1 = legendre_rand_basis_ref(x1, w, b, n)
    ref2 = legendre_rand_basis_ref(x2, w, b, n)

    assert out1.shape == (2, 8, n), out1.shape
    assert out2.shape == (3, 5, 7, n), out2.shape
    np.testing.assert_allclose(np.asarray(out1), np.asarray(ref1), rtol=1e-5, atol=1e-5)
    np.testing.assert_allclose(np.asarray(out2), np.asarray(ref2), rtol=1e-5, atol=1e-5)

    print("KERNEL_OK")
</pallas_src>

<mosaic_0001>
module attributes {stable_mosaic.version = 11 : i64} {
  func.func @_legendre_kernel(%arg0: i32, %arg1: memref<2xf32, #tpu.memory_space<smem>>, %arg2: memref<8x128xf32, #tpu.memory_space<vmem>>, %arg3: memref<6x8x128xf32, #tpu.memory_space<vmem>>) attributes {dimension_semantics = [#tpu.dimension_semantics<parallel>], iteration_bounds = array<i64: 1>, scalar_prefetch = 0 : i64, scratch_operands = 0 : i64, tpu.core_type = #tpu.core_type<tc>, window_params = [{transform_indices = @transform_0, window_bounds = array<i64: 2>}, {transform_indices = @transform_1, window_bounds = array<i64: 8, 128>}, {transform_indices = @transform_2, window_bounds = array<i64: 6, 8, 128>}]} {
    %c0 = arith.constant 0 : index
    %0 = memref.load %arg1[%c0] : memref<2xf32, #tpu.memory_space<smem>>
    %c1 = arith.constant 1 : index
    %1 = memref.load %arg1[%c1] : memref<2xf32, #tpu.memory_space<smem>>
    %c0_0 = arith.constant 0 : index
    %c0_1 = arith.constant 0 : index
    %2 = vector.load %arg2[%c0_0, %c0_1] : memref<8x128xf32, #tpu.memory_space<vmem>>, vector<8x128xf32>
    %3 = vector.broadcast %0 : f32 to vector<8x128xf32>
    %4 = arith.mulf %2, %3 : vector<8x128xf32>
    %5 = vector.broadcast %1 : f32 to vector<8x128xf32>
    %6 = arith.addf %4, %5 : vector<8x128xf32>
    %cst = arith.constant 1.000000e+00 : f32
    %7 = vector.broadcast %cst : f32 to vector<8x128xf32>
    %c0_2 = arith.constant 0 : index
    %c0_3 = arith.constant 0 : index
    %c0_4 = arith.constant 0 : index
    %8 = vector.load %arg3[%c0_2, %c0_3, %c0_4] : memref<6x8x128xf32, #tpu.memory_space<vmem>>, vector<1x8x128xf32>
    %9 = vector.shape_cast %8 : vector<1x8x128xf32> to vector<8x128xf32>
    %10 = vector.shape_cast %7 : vector<8x128xf32> to vector<1x8x128xf32>
    tpu.vector_store %arg3[%c0_2, %c0_3, %c0_4], %10 {strides = array<i32>} : memref<6x8x128xf32, #tpu.memory_space<vmem>>, vector<1x8x128xf32>,
    %c1_5 = arith.constant 1 : index
    %c0_6 = arith.constant 0 : index
    %c0_7 = arith.constant 0 : index
    %11 = vector.load %arg3[%c1_5, %c0_6, %c0_7] : memref<6x8x128xf32, #tpu.memory_space<vmem>>, vector<1x8x128xf32>
    %12 = vector.shape_cast %11 : vector<1x8x128xf32> to vector<8x128xf32>
    %13 = vector.shape_cast %6 : vector<8x128xf32> to vector<1x8x128xf32>
    tpu.vector_store %arg3[%c1_5, %c0_6, %c0_7], %13 {strides = array<i32>} : memref<6x8x128xf32, #tpu.memory_space<vmem>>, vector<1x8x128xf32>,
    %cst_8 = arith.constant 1.500000e+00 : f32
    %14 = vector.broadcast %cst_8 : f32 to vector<8x128xf32>
    %15 = arith.mulf %14, %6 : vector<8x128xf32>
    %16 = arith.mulf %15, %6 : vector<8x128xf32>
    %cst_9 = arith.constant 5.000000e-01 : f32
    %17 = vector.broadcast %cst_9 : f32 to vector<8x128xf32>
    %18 = arith.mulf %17, %7 : vector<8x128xf32>
    %19 = arith.subf %16, %18 : vector<8x128xf32>
    %c2 = arith.constant 2 : index
    %c0_10 = arith.constant 0 : index
    %c0_11 = arith.constant 0 : index
    %20 = vector.load %arg3[%c2, %c0_10, %c0_11] : memref<6x8x128xf32, #tpu.memory_space<vmem>>, vector<1x8x128xf32>
    %21 = vector.shape_cast %20 : vector<1x8x128xf32> to vector<8x128xf32>
    %22 = vector.shape_cast %19 : vector<8x128xf32> to vector<1x8x128xf32>
    tpu.vector_store %arg3[%c2, %c0_10, %c0_11], %22 {strides = array<i32>} : memref<6x8x128xf32, #tpu.memory_space<vmem>>, vector<1x8x128xf32>,
    %cst_12 = arith.constant 1.66666663 : f32
    %23 = vector.broadcast %cst_12 : f32 to vector<8x128xf32>
    %24 = arith.mulf %23, %6 : vector<8x128xf32>
    %25 = arith.mulf %24, %19 : vector<8x128xf32>
    %cst_13 = arith.constant 0.666666686 : f32
    %26 = vector.broadcast %cst_13 : f32 to vector<8x128xf32>
    %27 = arith.mulf %26, %6 : vector<8x128xf32>
    %28 = arith.subf %25, %27 : vector<8x128xf32>
    %c3 = arith.constant 3 : index
    %c0_14 = arith.constant 0 : index
    %c0_15 = arith.constant 0 : index
    %29 = vector.load %arg3[%c3, %c0_14, %c0_15] : memref<6x8x128xf32, #tpu.memory_space<vmem>>, vector<1x8x128xf32>
    %30 = vector.shape_cast %29 : vector<1x8x128xf32> to vector<8x128xf32>
    %31 = vector.shape_cast %28 : vector<8x128xf32> to vector<1x8x128xf32>
    tpu.vector_store %arg3[%c3, %c0_14, %c0_15], %31 {strides = array<i32>} : memref<6x8x128xf32, #tpu.memory_space<vmem>>, vector<1x8x128xf32>,
    %cst_16 = arith.constant 1.750000e+00 : f32
    %32 = vector.broadcast %cst_16 : f32 to vector<8x128xf32>
    %33 = arith.mulf %32, %6 : vector<8x128xf32>
    %34 = arith.mulf %33, %28 : vector<8x128xf32>
    %cst_17 = arith.constant 7.500000e-01 : f32
    %35 = vector.broadcast %cst_17 : f32 to vector<8x128xf32>
    %36 = arith.mulf %35, %19 : vector<8x128xf32>
    %37 = arith.subf %34, %36 : vector<8x128xf32>
    %c4 = arith.constant 4 : index
    %c0_18 = arith.constant 0 : index
    %c0_19 = arith.constant 0 : index
    %38 = vector.load %arg3[%c4, %c0_18, %c0_19] : memref<6x8x128xf32, #tpu.memory_space<vmem>>, vector<1x8x128xf32>
    %39 = vector.shape_cast %38 : vector<1x8x128xf32> to vector<8x128xf32>
    %40 = vector.shape_cast %37 : vector<8x128xf32> to vector<1x8x128xf32>
    tpu.vector_store %arg3[%c4, %c0_18, %c0_19], %40 {strides = array<i32>} : memref<6x8x128xf32, #tpu.memory_space<vmem>>, vector<1x8x128xf32>,
    %cst_20 = arith.constant 1.800000e+00 : f32
    %41 = vector.broadcast %cst_20 : f32 to vector<8x128xf32>
    %42 = arith.mulf %41, %6 : vector<8x128xf32>
    %43 = arith.mulf %42, %37 : vector<8x128xf32>
    %cst_21 = arith.constant 8.000000e-01 : f32
    %44 = vector.broadcast %cst_21 : f32 to vector<8x128xf32>
    %45 = arith.mulf %44, %28 : vector<8x128xf32>
    %46 = arith.subf %43, %45 : vector<8x128xf32>
    %c5 = arith.constant 5 : index
    %c0_22 = arith.constant 0 : index
    %c0_23 = arith.constant 0 : index
    %47 = vector.load %arg3[%c5, %c0_22, %c0_23] : memref<6x8x128xf32, #tpu.memory_space<vmem>>, vector<1x8x128xf32>
    %48 = vector.shape_cast %47 : vector<1x8x128xf32> to vector<8x128xf32>
    %49 = vector.shape_cast %46 : vector<8x128xf32> to vector<1x8x128xf32>
    tpu.vector_store %arg3[%c5, %c0_22, %c0_23], %49 {strides = array<i32>} : memref<6x8x128xf32, #tpu.memory_space<vmem>>, vector<1x8x128xf32>,
    return
  }
  func.func @transform_0(%arg0: i32) -> i32 {
    %c0_i32 = arith.constant 0 : i32
    %c0_i32_0 = arith.constant 0 : i32
    return %c0_i32 : i32
  }
  func.func @transform_1(%arg0: i32) -> (i32, i32) {
    %c0_i32 = arith.constant 0 : i32
    %c0_i32_0 = arith.constant 0 : i32
    return %arg0, %c0_i32 : i32, i32
  }
  func.func @transform_2(%arg0: i32) -> (i32, i32, i32) {
    %c0_i32 = arith.constant 0 : i32
    %c0_i32_0 = arith.constant 0 : i32
    %c0_i32_1 = arith.constant 0 : i32
    return %c0_i32, %arg0, %c0_i32_0 : i32, i32, i32
  }
}

</mosaic_0001>

<llo_original>
// kernel: tpu_custom_call.1
$region0: #{tpu_custom_call.1}
  #allocation0 [shape = 'u32[]', space=smem, size = 0x4, offset = 0x4, fixed_abs, tag = 'smem constant byte address 0x4 - core index']
  #allocation1 [shape = 'u32[144,128]{1,0:T(1,128)}', space=vmem, size = 0x12000, scoped, tag = 'internal scratch']
  %s0 = inlined_call_operand.hbm [shape: f32[2], index: 0, kind: input, shape index: {}]
  %s1 = inlined_call_operand.hbm [shape: f32[8,128], index: 1, kind: input, shape index: {}]
  %s2 = inlined_call_operand.hbm [shape: f32[6,8,128], index: 2, kind: output, shape index: {}]
  %s3 = sld [smem:[#allocation0]]
  $region26: #{tpu_custom_call.1} parent=0
    _
  %s5 = ssub.s32 1, %s3
  %s6 = scalar_select 0, %s5, %s3
  $region1: #{tpu_custom_call.1} parent=0
    #allocation2 [shape = 'u8[512]{0}', space=smem, size = 0x200, scoped, tag = 'input window, operand 0, single buffered']
    #allocation3 [shape = 's32[1]{0}', space=sflag, size = 0x4, scoped, tag = 'scoped memory for tpu_custom_call.1']
    #allocation4 [shape = 's32[1]{0}', space=sflag, size = 0x4, scoped, tag = 'scoped memory for tpu_custom_call.1']
    #allocation5 [shape = 's32[1]{0}', space=sflag, size = 0x4, scoped, tag = 'scoped memory for tpu_custom_call.1']
    #allocation6 [shape = 'u8[4096]{0}', space=vmem, size = 0x1000, scoped, tag = 'input window, operand 1, single buffered']
    #allocation7 [shape = 'u8[24576]{0}', space=vmem, size = 0x6000, scoped, tag = 'output window, operand 0, single buffered']
    %7 = vsyncpa [#allocation5], 0
    %8 = vsyncpa [#allocation3], 0
    %9 = vsyncpa [#allocation4], 0
    // Predicated region
    $region2: #{tpu_custom_call.1} parent=1 // pred_check
      _
    $region3: #{tpu_custom_call.1} parent=1 // pred_check_branch
      %11 = sbr.rel (0) target = $region5
    $region4: #{tpu_custom_call.1} parent=1 // pred_region
      %s13 = ssub.s32 16, 16
      %14 = vsyncadd [#allocation5], %s13
      %17 = dma.hbm_to_smem %s0, 16, [#allocation2], [#allocation5]
    $region5: #{tpu_custom_call.1} parent=1 // pred_fallthru
      _
    // Predicated region
    $region6: #{tpu_custom_call.1} parent=1 // pred_check
      _
    $region7: #{tpu_custom_call.1} parent=1 // pred_check_branch
      %19 = sbr.rel (0) target = $region9
    $region8: #{tpu_custom_call.1} parent=1 // pred_region
      %s21 = ssub.s32 128, 128
      %22 = vsyncadd [#allocation3], %s21
      %s24 = sshll.u32 [#allocation6], 4
      %s25 = int_to_ptr.vmem [resolvable:$true] %s24
      %27 = dma.hbm_to_vmem [thread:$0]  %s1, 128, %s25, [#allocation3]
    $region9: #{tpu_custom_call.1} parent=1 // pred_fallthru
      _
    // Predicated region
    $region10: #{tpu_custom_call.1} parent=1 // pred_check
      _
    $region11: #{tpu_custom_call.1} parent=1 // pred_check_branch
      %29 = sbr.rel (0) target = $region13
    $region12: #{tpu_custom_call.1} parent=1 // pred_region
      %30 = dma.done [#allocation5], 16
    $region13: #{tpu_custom_call.1} parent=1 // pred_fallthru
      _
    // Predicated region
    $region14: #{tpu_custom_call.1} parent=1 // pred_check
      _
    $region15: #{tpu_custom_call.1} parent=1 // pred_check_branch
      %32 = sbr.rel (0) target = $region17
    $region16: #{tpu_custom_call.1} parent=1 // pred_region
      %33 = dma.done [#allocation3], 128
    $region17: #{tpu_custom_call.1} parent=1 // pred_fallthru
      _
    %34 = sfence
    %s35 = sld [smem:[#allocation2]]
    %s36 = sld [smem:[#allocation2 + $0x1]]
    %v37 = vld [vmem:[#allocation6] sm:$0xff]
    %v38 = vstv %s35
    %v39 = vmul.f32 %v37, %v38
    %v40 = vstv %s36
    %v41 = vadd.f32 %v39, %v40
    %42 = vst [vmem:[#allocation7] sm:$0xff] 1.0
    %s43 = scalar_lea.vmem [#allocation7], 8
    %44 = vst [vmem:[%s43] sm:$0xff] %v41
    %v45 = vmul.f32 %v41, 1.5
    %v46 = vmul.f32 %v45, %v41
    %v47 = vsub.f32 %v46, 0.5
    %s48 = scalar_lea.vmem [#allocation7], 16
    %49 = vst [vmem:[%s48] sm:$0xff] %v47
    %v50 = vmul.f32 %v41, 1.6666666
    %v51 = vmul.f32 %v50, %v47
    %v52 = vmul.f32 %v41, 0.6666667
    %v53 = vsub.f32 %v51, %v52
    %s54 = scalar_lea.vmem [#allocation7], 24
    %55 = vst [vmem:[%s54] sm:$0xff] %v53
    %v56 = vmul.f32 %v41, 1.75
    %v57 = vmul.f32 %v56, %v53
    %v58 = vmul.f32 %v47, 0.75
    %v59 = vsub.f32 %v57, %v58
    %s60 = scalar_lea.vmem [#allocation7], 32
    %61 = vst [vmem:[%s60] sm:$0xff] %v59
    %v62 = vmul.f32 %v41, 1.8
    %v63 = vmul.f32 %v62, %v59
    %v64 = vmul.f32 %v53, 0.8
    %v65 = vsub.f32 %v63, %v64
    %s66 = scalar_lea.vmem [#allocation7], 40
    %67 = vst [vmem:[%s66] sm:$0xff] %v65
    // Predicated region
    $region18: #{tpu_custom_call.1} parent=1 // pred_check
      _
    $region19: #{tpu_custom_call.1} parent=1 // pred_check_branch
      %69 = sbr.rel (0) target = $region21
    $region20: #{tpu_custom_call.1} parent=1 // pred_region
      %s71 = ssub.s32 768, 768
      %72 = vsyncadd [#allocation4], %s71
      %s73 = sshll.u32 [#allocation7], 4
      %s74 = int_to_ptr.vmem [resolvable:$true] %s73
      %79 = dma.vmem_to_hbm [thread:$0]  %s74, 768, %s2, [#allocation4], 128, 128, 8
    $region21: #{tpu_custom_call.1} parent=1 // pred_fallthru
      _
    // Predicated region
    $region22: #{tpu_custom_call.1} parent=1 // pred_check
      _
    $region23: #{tpu_custom_call.1} parent=1 // pred_check_branch
      %81 = sbr.rel (0) target = $region25
    $region24: #{tpu_custom_call.1} parent=1 // pred_region
      %82 = dma.done [#allocation4], 768
    $region25: #{tpu_custom_call.1} parent=1 // pred_fallthru
      _
    %83 = vsyncpa [#allocation3], 1
    %84 = vsyncpa [#allocation4], 1
    %85 = vsyncpa [#allocation5], 1

</llo_original>
